<compile_context>
chip_gen: v6e
topology: v6e:2x2x1
jax: 0.10.0
libtpu: 0.0.40
codegen_flags: <defaults>
</compile_context>

<pallas_src>
import functools

import jax
import jax.numpy as jnp
from jax.experimental import pallas as pl
from jax.experimental.pallas import tpu as pltpu

# Deterministic RBF "kernel" hyper-parameters (kernel.input_dim == dim).
LENGTH_SCALE = 0.5
KERNEL_SCALE = 1.0


def grid_2d(min_x, max_x, min_y, max_y, n_xaxis, n_yaxis):
    """Flattened 2D grid of shape (n_xaxis * n_yaxis, 2) (matches set_grid)."""
    xs = jnp.linspace(min_x, max_x, n_xaxis, dtype=jnp.float32)
    ys = jnp.linspace(min_y, max_y, n_yaxis, dtype=jnp.float32)
    gx, gy = jnp.meshgrid(xs, ys, indexing="ij")
    return jnp.stack([gx.reshape(-1), gy.reshape(-1)], axis=-1)


def _choose_m_tile(M, cap=512):
    """Largest multiple of 128 that divides M and is <= cap; else M itself."""
    if M % 128 == 0:
        t = min(cap, M)
        t -= t % 128
        while t >= 128:
            if M % t == 0:
                return t
            t -= 128
    return M


def _choose_b_tile(bs, cap=8):
    """Largest divisor of bs that is <= cap (fold batches per grid step)."""
    t = min(bs, cap)
    while bs % t != 0:
        t -= 1
    return t


def _rkhs_embed_kernel(grid_ref, x_ref, yt_ref, out_ref, *, normalise):
    # grid_ref: (dim, TM)      x_ref: (B, n, dim)
    # yt_ref:   (B, dy+1, n)   out_ref: (B, dy+1, TM)
    g = grid_ref[...]            # (dim, TM) f32, lane-dense coordinates
    x = x_ref[...]               # (B, n, dim) f32
    yt = yt_ref[...]             # (B, dy+1, n) f32

    b_tile, n, dim = x.shape
    dyp1 = yt.shape[1]
    tm = g.shape[1]

    # Pairwise squared distances via VPU broadcast diffs (no MXU, no transpose,
    # exactly non-negative).  d2[b, j, m] = ||X[b, j] - grid[m]||^2
    d2 = jnp.zeros((b_tile, n, tm), jnp.float32)
    for d in range(dim):                       # static loop, dim in {2, 3}
        diff = x[:, :, d:d + 1] - g[d:d + 1, :][None]   # (B, n, 1)-(1, 1, TM)
        d2 = d2 + diff * diff

    # RBF Gram block k(X, grid): f32 exp on the EUP (steady-state bottleneck).
    k = KERNEL_SCALE * jnp.exp(d2 * (-0.5 / (LENGTH_SCALE * LENGTH_SCALE)))

    # Exact-f32 contraction over n, one output channel at a time (dy+1 is tiny,
    # so this VPU/XLU work hides under the EUP exp; an MXU matmul would be
    # 3/256 utilised and, at default precision, too inaccurate once divided by
    # a near-zero density during normalisation).
    chans = []
    for c in range(dyp1):                      # static loop, dy+1 small
        w = yt[:, c, :]                        # (B, n)
        chans.append(jnp.sum(w[:, :, None] * k, axis=1))   # (B, TM) f32

    if normalise:
        denom = chans[0] + 1e-6                # density channel, >= 0
        chans = [chans[0]] + [chans[c] / denom for c in range(1, dyp1)]

    y_grid = jnp.stack(chans, axis=1)          # (B, dy+1, TM), lane-dense
    out_ref[...] = y_grid.astype(out_ref.dtype)


def discretised_rkhs_embedding(grid_pts, X, Y, *, normalise=True,
                               m_tile_cap=512, b_tile_cap=8):
    """Pallas implementation of DiscretisedRKHSEmbedding.forward.

    Returns (grid[None], Y_grid) exactly like the torch module.
    """
    bs, n, dim = X.shape
    M, gdim = grid_pts.shape
    assert gdim == dim
    dy = Y.shape[-1]
    dyp1 = dy + 1

    # Plain-JAX glue: prepend the density channel and move to the transposed
    # (lane-dense) layouts the kernel expects.
    ones = jnp.ones((bs, n, 1), dtype=jnp.float32)
    Y1T = jnp.transpose(
        jnp.concatenate([ones, Y.astype(jnp.float32)], axis=-1), (0, 2, 1)
    )                                                    # (bs, dy+1, n)
    grid_t = jnp.transpose(grid_pts.astype(jnp.float32), (1, 0))   # (dim, M)
    X32 = X.astype(jnp.float32)

    # Tile sizes: TM is a multiple of 128 (unmasked lane-dense stores); the cap
    # keeps the (B_TILE, n, TM) f32 temporaries (d2, k, per-channel products)
    # well under the 32 MiB scoped VMEM limit (v7x has 64 MiB physical VMEM).
    TM = _choose_m_tile(M, cap=m_tile_cap)
    BT = _choose_b_tile(bs, cap=b_tile_cap)

    kernel_fn = functools.partial(_rkhs_embed_kernel, normalise=normalise)

    y_grid_t = pl.pallas_call(
        kernel_fn,
        out_shape=jax.ShapeDtypeStruct((bs, dyp1, M), jnp.float32),
        grid_spec=pltpu.PrefetchScalarGridSpec(
            num_scalar_prefetch=0,
            grid=(bs // BT, M // TM),
            in_specs=[
                # Grid coordinates, tiled along M (lane-dense (dim, TM)).
                pl.BlockSpec((dim, TM), lambda b, m: (0, m)),
                # X / Y1^T stay resident across the M axis (same block index).
                pl.BlockSpec((BT, n, dim), lambda b, m: (b, 0, 0)),
                pl.BlockSpec((BT, dyp1, n), lambda b, m: (b, 0, 0)),
            ],
            out_specs=pl.BlockSpec((BT, dyp1, TM), lambda b, m: (b, 0, m)),
        ),
        compiler_params=pltpu.CompilerParams(
            dimension_semantics=("parallel", "parallel"),
            vmem_limit_bytes=32 * 1024 * 1024,
        ),
    )(grid_t, X32, Y1T)

    # Back to the module's (bs, M, dy+1) layout (plain JAX, outside kernel).
    y_grid = jnp.transpose(y_grid_t, (0, 2, 1))
    return grid_pts[None], y_grid


def _reference(grid_pts, X, Y, *, normalise=True):
    """Pure-JAX reference for correctness checking."""
    ones = jnp.ones(Y.shape[:-1] + (1,), dtype=jnp.float32)
    Y1 = jnp.concatenate([ones, Y.astype(jnp.float32)], axis=-1)  # (bs, n, dy+1)
    d2 = jnp.sum(
        (grid_pts[None, :, None, :] - X[:, None, :, :]) ** 2, axis=-1
    )                                                             # (bs, M, n)
    k = KERNEL_SCALE * jnp.exp(-d2 / (2.0 * LENGTH_SCALE ** 2))
    y_grid = jnp.einsum("bmn,bnc->bmc", k, Y1,
                        precision=jax.lax.Precision.HIGHEST)
    if normalise:
        feats = y_grid[:, :, 1:] / (y_grid[:, :, 0:1] + 1e-6)
        y_grid = jnp.concatenate([y_grid[:, :, 0:1], feats], axis=-1)
    return grid_pts[None], y_grid


if __name__ == "__main__":
    key = jax.random.PRNGKey(0)
    kx, ky = jax.random.split(key)

    # Module config: dim=2, grid_ranges=[-1, 1], n_axes=16 -> M = 256 grid pts.
    dim = 2
    n_axes = 16
    grid_pts = grid_2d(-1.0, 1.0, -1.0, 1.0, n_axes, n_axes)      # (256, 2)

    bs, n, dy = 2, 8, 2
    X = jax.random.uniform(kx, (bs, n, dim), minval=-1.0, maxval=1.0,
                           dtype=jnp.float32)
    Y = jax.random.normal(ky, (bs, n, dy), dtype=jnp.float32)

    # --- normalised output (density-divided feature channels) --------------
    grid_out, y_grid = discretised_rkhs_embedding(grid_pts, X, Y,
                                                  normalise=True)
    y_grid = jax.block_until_ready(y_grid)
    grid_ref, y_ref = _reference(grid_pts, X, Y, normalise=True)

    assert grid_out.shape == (1, n_axes * n_axes, dim)
    assert y_grid.shape == (bs, n_axes * n_axes, dy + 1)
    assert jnp.allclose(y_grid, y_ref, atol=2e-3, rtol=2e-3), (
        "normalised output mismatch vs reference")

    # --- raw (un-normalised) kernel smoothing -------------------------------
    _, y_grid_raw = discretised_rkhs_embedding(grid_pts, X, Y,
                                               normalise=False)
    y_grid_raw = jax.block_until_ready(y_grid_raw)
    _, y_ref_raw = _reference(grid_pts, X, Y, normalise=False)
    assert jnp.allclose(y_grid_raw, y_ref_raw, atol=2e-3, rtol=2e-3), (
        "un-normalised output mismatch vs reference")

    print("KERNEL_OK")
</pallas_src>

<mosaic_0001>
module attributes {stable_mosaic.version = 11 : i64} {
  func.func @_rkhs_embed_kernel(%arg0: i32, %arg1: i32, %arg2: memref<2x256xf32, #tpu.memory_space<vmem>>, %arg3: memref<2x8x2xf32, #tpu.memory_space<vmem>>, %arg4: memref<2x3x8xf32, #tpu.memory_space<vmem>>, %arg5: memref<2x3x256xf32, #tpu.memory_space<vmem>>) attributes {dimension_semantics = [#tpu.dimension_semantics<parallel>, #tpu.dimension_semantics<parallel>], iteration_bounds = array<i64: 1, 1>, scalar_prefetch = 0 : i64, scratch_operands = 0 : i64, tpu.core_type = #tpu.core_type<tc>, window_params = [{transform_indices = @transform_0, window_bounds = array<i64: 2, 256>}, {transform_indices = @transform_1, window_bounds = array<i64: 2, 8, 2>}, {transform_indices = @transform_2, window_bounds = array<i64: 2, 3, 8>}, {transform_indices = @transform_3, window_bounds = array<i64: 2, 3, 256>}]} {
    %c0 = arith.constant 0 : index
    %c0_0 = arith.constant 0 : index
    %0 = vector.load %arg2[%c0, %c0_0] : memref<2x256xf32, #tpu.memory_space<vmem>>, vector<2x256xf32>
    %c0_1 = arith.constant 0 : index
    %c0_2 = arith.constant 0 : index
    %c0_3 = arith.constant 0 : index
    %1 = vector.load %arg3[%c0_1, %c0_2, %c0_3] : memref<2x8x2xf32, #tpu.memory_space<vmem>>, vector<2x8x2xf32>
    %c0_4 = arith.constant 0 : index
    %c0_5 = arith.constant 0 : index
    %c0_6 = arith.constant 0 : index
    %2 = vector.load %arg4[%c0_4, %c0_5, %c0_6] : memref<2x3x8xf32, #tpu.memory_space<vmem>>, vector<2x3x8xf32>
    %cst = arith.constant 0.000000e+00 : f32
    %3 = vector.broadcast %cst : f32 to vector<2x8x256xf32>
    %4 = vector.extract_strided_slice %1 {offsets = [0, 0, 0], sizes = [2, 8, 1], strides = [1, 1, 1]} : vector<2x8x2xf32> to vector<2x8x1xf32>
    %5 = vector.extract_strided_slice %0 {offsets = [0, 0], sizes = [1, 256], strides = [1, 1]} : vector<2x256xf32> to vector<1x256xf32>
    %6 = vector.shape_cast %5 : vector<1x256xf32> to vector<1x1x256xf32>
    %7 = vector.broadcast %4 : vector<2x8x1xf32> to vector<2x8x256xf32>
    %8 = vector.broadcast %6 : vector<1x1x256xf32> to vector<2x8x256xf32>
    %9 = arith.subf %7, %8 : vector<2x8x256xf32>
    %10 = arith.mulf %9, %9 : vector<2x8x256xf32>
    %11 = arith.addf %3, %10 : vector<2x8x256xf32>
    %12 = vector.extract_strided_slice %1 {offsets = [0, 0, 1], sizes = [2, 8, 1], strides = [1, 1, 1]} : vector<2x8x2xf32> to vector<2x8x1xf32>
    %13 = vector.extract_strided_slice %0 {offsets = [1, 0], sizes = [1, 256], strides = [1, 1]} : vector<2x256xf32> to vector<1x256xf32>
    %14 = vector.shape_cast %13 : vector<1x256xf32> to vector<1x1x256xf32>
    %15 = vector.broadcast %12 : vector<2x8x1xf32> to vector<2x8x256xf32>
    %16 = vector.broadcast %14 : vector<1x1x256xf32> to vector<2x8x256xf32>
    %17 = arith.subf %15, %16 : vector<2x8x256xf32>
    %18 = arith.mulf %17, %17 : vector<2x8x256xf32>
    %19 = arith.addf %11, %18 : vector<2x8x256xf32>
    %cst_7 = arith.constant -2.000000e+00 : f32
    %20 = vector.broadcast %cst_7 : f32 to vector<2x8x256xf32>
    %21 = arith.mulf %19, %20 : vector<2x8x256xf32>
    %22 = math.exp %21 : vector<2x8x256xf32>
    %cst_8 = arith.constant 1.000000e+00 : f32
    %23 = vector.broadcast %cst_8 : f32 to vector<2x8x256xf32>
    %24 = arith.mulf %23, %22 : vector<2x8x256xf32>
    %25 = vector.extract_strided_slice %2 {offsets = [0, 0, 0], sizes = [2, 1, 8], strides = [1, 1, 1]} : vector<2x3x8xf32> to vector<2x1x8xf32>
    %26 = vector.shape_cast %25 : vector<2x1x8xf32> to vector<2x8xf32>
    %27 = vector.shape_cast %26 : vector<2x8xf32> to vector<2x8x1xf32>
    %28 = vector.broadcast %27 : vector<2x8x1xf32> to vector<2x8x256xf32>
    %29 = arith.mulf %28, %24 : vector<2x8x256xf32>
    %cst_9 = arith.constant dense<0.000000e+00> : vector<2x256xf32>
    %30 = vector.multi_reduction <add>, %29, %cst_9 [1] : vector<2x8x256xf32> to vector<2x256xf32>
    %31 = vector.extract_strided_slice %2 {offsets = [0, 1, 0], sizes = [2, 1, 8], strides = [1, 1, 1]} : vector<2x3x8xf32> to vector<2x1x8xf32>
    %32 = vector.shape_cast %31 : vector<2x1x8xf32> to vector<2x8xf32>
    %33 = vector.shape_cast %32 : vector<2x8xf32> to vector<2x8x1xf32>
    %34 = vector.broadcast %33 : vector<2x8x1xf32> to vector<2x8x256xf32>
    %35 = arith.mulf %34, %24 : vector<2x8x256xf32>
    %cst_10 = arith.constant dense<0.000000e+00> : vector<2x256xf32>
    %36 = vector.multi_reduction <add>, %35, %cst_10 [1] : vector<2x8x256xf32> to vector<2x256xf32>
    %37 = vector.extract_strided_slice %2 {offsets = [0, 2, 0], sizes = [2, 1, 8], strides = [1, 1, 1]} : vector<2x3x8xf32> to vector<2x1x8xf32>
    %38 = vector.shape_cast %37 : vector<2x1x8xf32> to vector<2x8xf32>
    %39 = vector.shape_cast %38 : vector<2x8xf32> to vector<2x8x1xf32>
    %40 = vector.broadcast %39 : vector<2x8x1xf32> to vector<2x8x256xf32>
    %41 = arith.mulf %40, %24 : vector<2x8x256xf32>
    %cst_11 = arith.constant dense<0.000000e+00> : vector<2x256xf32>
    %42 = vector.multi_reduction <add>, %41, %cst_11 [1] : vector<2x8x256xf32> to vector<2x256xf32>
    %cst_12 = arith.constant 9.99999997E-7 : f32
    %43 = vector.broadcast %cst_12 : f32 to vector<2x256xf32>
    %44 = arith.addf %30, %43 : vector<2x256xf32>
    %45 = arith.divf %36, %44 : vector<2x256xf32>
    %46 = arith.divf %42, %44 : vector<2x256xf32>
    %47 = vector.shape_cast %30 : vector<2x256xf32> to vector<2x1x256xf32>
    %48 = vector.shape_cast %45 : vector<2x256xf32> to vector<2x1x256xf32>
    %49 = vector.shape_cast %46 : vector<2x256xf32> to vector<2x1x256xf32>
    %50 = tpu.concatenate %47, %48, %49 in 1 : vector<2x1x256xf32>, vector<2x1x256xf32>, vector<2x1x256xf32> -> vector<2x3x256xf32>
    %c0_13 = arith.constant 0 : index
    %c0_14 = arith.constant 0 : index
    %c0_15 = arith.constant 0 : index
    %51 = vector.load %arg5[%c0_13, %c0_14, %c0_15] : memref<2x3x256xf32, #tpu.memory_space<vmem>>, vector<2x3x256xf32>
    tpu.vector_store %arg5[%c0_13, %c0_14, %c0_15], %50 {strides = array<i32>} : memref<2x3x256xf32, #tpu.memory_space<vmem>>, vector<2x3x256xf32>,
    return
  }
  func.func @transform_0(%arg0: i32, %arg1: i32) -> (i32, i32) {
    %c0_i32 = arith.constant 0 : i32
    %c0_i32_0 = arith.constant 0 : i32
    return %c0_i32, %arg1 : i32, i32
  }
  func.func @transform_1(%arg0: i32, %arg1: i32) -> (i32, i32, i32) {
    %c0_i32 = arith.constant 0 : i32
    %c0_i32_0 = arith.constant 0 : i32
    %c0_i32_1 = arith.constant 0 : i32
    return %arg0, %c0_i32, %c0_i32_0 : i32, i32, i32
  }
  func.func @transform_2(%arg0: i32, %arg1: i32) -> (i32, i32, i32) {
    %c0_i32 = arith.constant 0 : i32
    %c0_i32_0 = arith.constant 0 : i32
    %c0_i32_1 = arith.constant 0 : i32
    return %arg0, %c0_i32, %c0_i32_0 : i32, i32, i32
  }
  func.func @transform_3(%arg0: i32, %arg1: i32) -> (i32, i32, i32) {
    %c0_i32 = arith.constant 0 : i32
    %c0_i32_0 = arith.constant 0 : i32
    return %arg0, %c0_i32, %arg1 : i32, i32, i32
  }
}

</mosaic_0001>

<llo_original>
// kernel: tpu_custom_call.1
$region0: #{tpu_custom_call.1}
  #allocation0 [shape = 'u32[]', space=smem, size = 0x4, offset = 0x4, fixed_abs, tag = 'smem constant byte address 0x4 - core index']
  #allocation1 [shape = 'u32[144,128]{1,0:T(1,128)}', space=vmem, size = 0x12000, scoped, tag = 'internal scratch']
  %s0 = inlined_call_operand.vmem [shape: f32[2,256], index: 0, kind: input, shape index: {}]
  %s1 = inlined_call_operand.vmem [shape: f32[2,8,2], index: 1, kind: input, shape index: {}]
  %s2 = inlined_call_operand.vmem [shape: f32[2,3,8], index: 2, kind: input, shape index: {}]
  %s3 = inlined_call_operand.vmem [shape: f32[2,3,256], index: 3, kind: output, shape index: {}]
  %s4 = sld [smem:[#allocation0]]
  $region22: #{tpu_custom_call.1} parent=0
    _
  %s6 = ssub.s32 1, %s4
  %s7 = scalar_select 0, %s6, %s4
  // Predicated region
  $region2: #{tpu_custom_call.1} parent=0 // pred_check
    _
  $region3: #{tpu_custom_call.1} parent=0 // pred_check_branch
    %9 = sbr.rel (0) target = $region5
  $region4: #{tpu_custom_call.1} parent=0 // pred_region
    _
  $region5: #{tpu_custom_call.1} parent=0 // pred_fallthru
    _
  // Predicated region
  $region6: #{tpu_custom_call.1} parent=0 // pred_check
    _
  $region7: #{tpu_custom_call.1} parent=0 // pred_check_branch
    %11 = sbr.rel (0) target = $region9
  $region8: #{tpu_custom_call.1} parent=0 // pred_region
    _
  $region9: #{tpu_custom_call.1} parent=0 // pred_fallthru
    _
  // Predicated region
  $region10: #{tpu_custom_call.1} parent=0 // pred_check
    _
  $region11: #{tpu_custom_call.1} parent=0 // pred_check_branch
    %13 = sbr.rel (0) target = $region13
  $region12: #{tpu_custom_call.1} parent=0 // pred_region
    _
  $region13: #{tpu_custom_call.1} parent=0 // pred_fallthru
    _
  %v14 = vld [vmem:[%s0] sm:$0xf]
  %v15 = vld [vmem:[%s1] sm:$0xff]
  %v16 = vld [vmem:[%s1 + $0x8] sm:$0xff]
  %v17 = vld [vmem:[%s2] sm:$0x7]
  %v18 = vld [vmem:[%s2 + $0x4] sm:$0x7]
  %20 = vset.pattern.permute.xlu0 0
  %21 = vperm.xlu0 %20, %v15
  %v22 = vpop.permute.xlu0 %21
  %25 = vset.pattern.permute.xlu0 0
  %26 = vperm.xlu0 %25, %v16
  %v27 = vpop.permute.xlu0 %26
  %v30 = vlaneseq
  %v31 = vshrl.u32 %v30, 7
  %v32 = vsub.s32 0, %v31
  %v33 = vrot.slane %v14, %v32
  %v34 = vlaneseq
  %v35 = vshrl.u32 %v34, 7
  %v36 = vsub.s32 2, %v35
  %v37 = vrot.slane %v14, %v36
  %v40 = vlaneseq
  %v41 = vshrl.u32 %v40, 7
  %v42 = vsub.s32 0, %v41
  %v43 = vrot.slane %v33, %v42
  %v44 = vlaneseq
  %v45 = vshrl.u32 %v44, 7
  %v46 = vsub.s32 0, %v45
  %v47 = vrot.slane %v37, %v46
  %v48 = vsub.f32 %v22, %v43
  %v49 = vsub.f32 %v22, %v47
  %v50 = vsub.f32 %v27, %v43
  %v51 = vsub.f32 %v27, %v47
  %v52 = vmul.f32 %v48, %v48
  %v53 = vmul.f32 %v49, %v49
  %v54 = vmul.f32 %v50, %v50
  %v55 = vmul.f32 %v51, %v51
  %v56 = vadd.f32 %v52, 0.0
  %v57 = vadd.f32 %v53, 0.0
  %v58 = vadd.f32 %v54, 0.0
  %v59 = vadd.f32 %v55, 0.0
  %60 = vset.pattern.permute.xlu0 1
  %61 = vperm.xlu0 %60, %v15
  %v62 = vpop.permute.xlu0 %61
  %64 = vset.pattern.permute.xlu0 1
  %65 = vperm.xlu0 %64, %v16
  %v66 = vpop.permute.xlu0 %65
  %v68 = vlaneseq
  %v69 = vshrl.u32 %v68, 7
  %v70 = vsub.s32 1, %v69
  %v71 = vrot.slane %v14, %v70
  %v72 = vlaneseq
  %v73 = vshrl.u32 %v72, 7
  %v74 = vsub.s32 3, %v73
  %v75 = vrot.slane %v14, %v74
  %v78 = vlaneseq
  %v79 = vshrl.u32 %v78, 7
  %v80 = vsub.s32 1, %v79
  %v81 = vrot.slane %v71, %v80
  %v82 = vlaneseq
  %v83 = vshrl.u32 %v82, 7
  %v84 = vsub.s32 1, %v83
  %v85 = vrot.slane %v75, %v84
  %v86 = vsub.f32 %v62, %v81
  %v87 = vsub.f32 %v62, %v85
  %v88 = vsub.f32 %v66, %v81
  %v89 = vsub.f32 %v66, %v85
  %v90 = vmul.f32 %v86, %v86
  %v91 = vmul.f32 %v87, %v87
  %v92 = vmul.f32 %v88, %v88
  %v93 = vmul.f32 %v89, %v89
  %v94 = vadd.f32 %v56, %v90
  %v95 = vadd.f32 %v57, %v91
  %v96 = vadd.f32 %v58, %v92
  %v97 = vadd.f32 %v59, %v93
  %v98 = vmul.f32 %v94, -2.0
  %v99 = vmul.f32 %v95, -2.0
  %v100 = vmul.f32 %v96, -2.0
  %v101 = vmul.f32 %v97, -2.0
  %v102 = vmul.f32 %v98, 1.442695
  %v103 = vpow.pop %v102
  %v104 = vmul.f32 %v99, 1.442695
  %v105 = vpow.pop %v104
  %v106 = vmul.f32 %v100, 1.442695
  %v107 = vpow.pop %v106
  %v108 = vmul.f32 %v101, 1.442695
  %v109 = vpow.pop %v108
  %v110 = vlaneseq
  %v111 = vshrl.u32 %v110, 7
  %v112 = vsub.s32 0, %v111
  %v113 = vrot.slane %v17, %v112
  %115 = vbcast.lane.b32.xlu0 %v113, 256
  %v116 = vpop.permute.xlu0 %115
  %v117 = vlaneseq
  %v118 = vshrl.u32 %v117, 7
  %v119 = vsub.s32 0, %v118
  %v120 = vrot.slane %v18, %v119
  %122 = vbcast.lane.b32.xlu0 %v120, 256
  %v123 = vpop.permute.xlu0 %122
  %v124 = vmul.f32 %v116, %v103
  %v125 = vmul.f32 %v116, %v105
  %v126 = vmul.f32 %v123, %v107
  %v127 = vmul.f32 %v123, %v109
  %v128 = vrot.slane %v124, 4
  %v129 = vadd.f32 %v124, %v128
  %v130 = vrot.slane %v129, 2
  %v131 = vadd.f32 %v129, %v130
  %v132 = vrot.slane %v131, 1
  %v133 = vadd.f32 %v131, %v132
  %v134 = vrot.slane %v125, 4
  %v135 = vadd.f32 %v125, %v134
  %v136 = vrot.slane %v135, 2
  %v137 = vadd.f32 %v135, %v136
  %v138 = vrot.slane %v137, 1
  %v139 = vadd.f32 %v137, %v138
  %v140 = vrot.slane %v126, 4
  %v141 = vadd.f32 %v126, %v140
  %v142 = vrot.slane %v141, 2
  %v143 = vadd.f32 %v141, %v142
  %v144 = vrot.slane %v143, 1
  %v145 = vadd.f32 %v143, %v144
  %v146 = vrot.slane %v127, 4
  %v147 = vadd.f32 %v127, %v146
  %v148 = vrot.slane %v147, 2
  %v149 = vadd.f32 %v147, %v148
  %v150 = vrot.slane %v149, 1
  %v151 = vadd.f32 %v149, %v150
  %v152 = vlaneseq
  %v153 = vshrl.u32 %v152, 7
  %v154 = vsub.s32 1, %v153
  %v155 = vrot.slane %v17, %v154
  %157 = vbcast.lane.b32.xlu0 %v155, 256
  %v158 = vpop.permute.xlu0 %157
  %v159 = vlaneseq
  %v160 = vshrl.u32 %v159, 7
  %v161 = vsub.s32 1, %v160
  %v162 = vrot.slane %v18, %v161
  %164 = vbcast.lane.b32.xlu0 %v162, 256
  %v165 = vpop.permute.xlu0 %164
  %v166 = vmul.f32 %v158, %v103
  %v167 = vmul.f32 %v158, %v105
  %v168 = vmul.f32 %v165, %v107
  %v169 = vmul.f32 %v165, %v109
  %v170 = vrot.slane %v166, 4
  %v171 = vadd.f32 %v166, %v170
  %v172 = vrot.slane %v171, 2
  %v173 = vadd.f32 %v171, %v172
  %v174 = vrot.slane %v173, 1
  %v175 = vadd.f32 %v173, %v174
  %v176 = vrot.slane %v167, 4
  %v177 = vadd.f32 %v167, %v176
  %v178 = vrot.slane %v177, 2
  %v179 = vadd.f32 %v177, %v178
  %v180 = vrot.slane %v179, 1
  %v181 = vadd.f32 %v179, %v180
  %v182 = vrot.slane %v168, 4
  %v183 = vadd.f32 %v168, %v182
  %v184 = vrot.slane %v183, 2
  %v185 = vadd.f32 %v183, %v184
  %v186 = vrot.slane %v185, 1
  %v187 = vadd.f32 %v185, %v186
  %v188 = vrot.slane %v169, 4
  %v189 = vadd.f32 %v169, %v188
  %v190 = vrot.slane %v189, 2
  %v191 = vadd.f32 %v189, %v190
  %v192 = vrot.slane %v191, 1
  %v193 = vadd.f32 %v191, %v192
  %v194 = vlaneseq
  %v195 = vshrl.u32 %v194, 7
  %v196 = vsub.s32 2, %v195
  %v197 = vrot.slane %v17, %v196
  %199 = vbcast.lane.b32.xlu0 %v197, 256
  %v200 = vpop.permute.xlu0 %199
  %v201 = vlaneseq
  %v202 = vshrl.u32 %v201, 7
  %v203 = vsub.s32 2, %v202
  %v204 = vrot.slane %v18, %v203
  %206 = vbcast.lane.b32.xlu0 %v204, 256
  %v207 = vpop.permute.xlu0 %206
  %v208 = vmul.f32 %v200, %v103
  %v209 = vmul.f32 %v200, %v105
  %v210 = vmul.f32 %v207, %v107
  %v211 = vmul.f32 %v207, %v109
  %v212 = vrot.slane %v208, 4
  %v213 = vadd.f32 %v208, %v212
  %v214 = vrot.slane %v213, 2
  %v215 = vadd.f32 %v213, %v214
  %v216 = vrot.slane %v215, 1
  %v217 = vadd.f32 %v215, %v216
  %v218 = vrot.slane %v209, 4
  %v219 = vadd.f32 %v209, %v218
  %v220 = vrot.slane %v219, 2
  %v221 = vadd.f32 %v219, %v220
  %v222 = vrot.slane %v221, 1
  %v223 = vadd.f32 %v221, %v222
  %v224 = vrot.slane %v210, 4
  %v225 = vadd.f32 %v210, %v224
  %v226 = vrot.slane %v225, 2
  %v227 = vadd.f32 %v225, %v226
  %v228 = vrot.slane %v227, 1
  %v229 = vadd.f32 %v227, %v228
  %v230 = vrot.slane %v211, 4
  %v231 = vadd.f32 %v211, %v230
  %v232 = vrot.slane %v231, 2
  %v233 = vadd.f32 %v231, %v232
  %v234 = vrot.slane %v233, 1
  %v235 = vadd.f32 %v233, %v234
  %v236 = vadd.f32 %v133, 1e-06
  %v237 = vadd.f32 %v139, 1e-06
  %v238 = vadd.f32 %v145, 1e-06
  %v239 = vadd.f32 %v151, 1e-06
  %v240 = vrcp.pop %v236
  %v241 = vmul.f32 %v175, %v240
  %v242 = vrcp.pop %v237
  %v243 = vmul.f32 %v181, %v242
  %v244 = vrcp.pop %v238
  %v245 = vmul.f32 %v187, %v244
  %v246 = vrcp.pop %v239
  %v247 = vmul.f32 %v193, %v246
  %v248 = vmul.f32 %v217, %v240
  %v249 = vmul.f32 %v223, %v242
  %v250 = vmul.f32 %v229, %v244
  %v251 = vmul.f32 %v235, %v246
  %vm252 = vcmask 1040384
  %v253 = vsel %vm252, %v133, %v241
  %v254 = vsel %vm252, %v139, %v243
  %v255 = vsel %vm252, %v145, %v245
  %v256 = vsel %vm252, %v151, %v247
  %vm257 = vcmask 1041408
  %v258 = vsel %vm257, %v253, %v248
  %v259 = vsel %vm257, %v254, %v249
  %v260 = vsel %vm257, %v255, %v250
  %v261 = vsel %vm257, %v256, %v251
  %v266 = vcombine.low %v258, %v259
  %v267 = vcombine.low %v260, %v261
  %270 = vst [vmem:[%s3] sm:$0x77] %v266
  %271 = vst [vmem:[%s3 + $0x8] sm:$0x77] %v267
  // Predicated region
  $region14: #{tpu_custom_call.1} parent=0 // pred_check
    _
  $region15: #{tpu_custom_call.1} parent=0 // pred_check_branch
    %273 = sbr.rel (0) target = $region17
  $region16: #{tpu_custom_call.1} parent=0 // pred_region
    _
  $region17: #{tpu_custom_call.1} parent=0 // pred_fallthru
    _
  // Predicated region
  $region18: #{tpu_custom_call.1} parent=0 // pred_check
    _
  $region19: #{tpu_custom_call.1} parent=0 // pred_check_branch
    %275 = sbr.rel (0) target = $region21
  $region20: #{tpu_custom_call.1} parent=0 // pred_region
    _
  $region21: #{tpu_custom_call.1} parent=0 // pred_fallthru
    _

</llo_original>
